<compile_context>
chip_gen: v7x
topology: tpu7x:2x2x1
jax: 0.10.0
libtpu: 0.0.40
codegen_flags: <defaults>
</compile_context>

<pallas_src>
import jax
import jax.numpy as jnp
from jax.experimental import pallas as pl
from jax.experimental.pallas import tpu as pltpu


# ---------------------------------------------------------------------------
# Kernels
# ---------------------------------------------------------------------------

def _sa_kernel_2d(x_ref, w1t_ref, b1_ref, w2_ref, b2_ref, out_ref, att_ref):
    """One (C, T) spatial tile of one batch element.

    x_ref   : (C, T)   channels on sublanes, spatial on lanes
    w1t_ref : (Ch, C)  first 1x1 conv weight, transposed
    b1_ref  : (Ch, 1)  first conv bias
    w2_ref  : (Ch, 1)  second 1x1 conv weight (per-sublane scale)
    b2_ref  : (1,)     second conv bias, SMEM scalar
    out_ref : (C, T)   x * attention
    att_ref : (1, T)   attention map (lane-dense)
    """
    x = x_ref[...]                                                         # (C, T)
    h = jnp.dot(w1t_ref[...], x, preferred_element_type=jnp.float32)      # (Ch, T)
    h = jnp.maximum(h + b1_ref[...], 0.0)
    logits = jnp.sum(h * w2_ref[...], axis=0, keepdims=True) + b2_ref[0]  # (1, T)
    att = jax.nn.sigmoid(logits)
    att_ref[...] = att.astype(att_ref.dtype)
    out_ref[...] = (x * att.astype(x.dtype)).astype(out_ref.dtype)


def _sa_kernel_3d(x_ref, w1t_ref, b1_ref, w2_ref, b2_ref, out_ref, att_ref):
    """A (B_blk, C, T) block covering several batch elements (small images)."""
    x = x_ref[...]                                                         # (Bb, C, T)
    bb = x.shape[0]
    w1t = jnp.broadcast_to(w1t_ref[...][None], (bb,) + w1t_ref.shape)      # (Bb, Ch, C)
    h = jnp.einsum('bhc,bct->bht', w1t, x,
                   preferred_element_type=jnp.float32)                     # (Bb, Ch, T)
    h = jnp.maximum(h + b1_ref[...][None], 0.0)
    logits = jnp.sum(h * w2_ref[...][None], axis=1, keepdims=True) + b2_ref[0]
    att = jax.nn.sigmoid(logits)                                           # (Bb, 1, T)
    att_ref[...] = att.astype(att_ref.dtype)
    out_ref[...] = (x * att.astype(x.dtype)).astype(out_ref.dtype)


# ---------------------------------------------------------------------------
# Tile-selection helpers (all trace-time Python)
# ---------------------------------------------------------------------------

def _ceil_div(a, b):
    return -(-a // b)


def _round_up(a, m):
    return _ceil_div(a, m) * m


def _largest_divisor_leq(n, cap):
    cap = max(1, min(n, cap))
    for d in range(cap, 0, -1):
        if n % d == 0:
            return d
    return 1


def _largest_aligned_divisor(n, cap, align=128):
    best = 0
    k = align
    top = min(n, cap)
    while k <= top:
        if n % k == 0:
            best = k
        k += align
    return best


def _chip_defaults():
    """(per-step HBM traffic target, VMEM tile budget, vmem_limit hard cap)."""
    kind = ""
    try:
        kind = jax.devices()[0].device_kind.lower()
    except Exception:
        pass
    if "v7" in kind:                       # 3.2 TB/s HBM, 64 MiB VMEM per TC
        return 8 << 20, 36 << 20, 52 << 20
    if "v6" in kind:                       # 1.3-1.4 TB/s HBM, 128 MiB VMEM
        return 4 << 20, 48 << 20, 96 << 20
    if "v5" in kind:                       # 0.8 TB/s HBM, 128 MiB VMEM
        return 3 << 20, 40 << 20, 96 << 20
    return 4 << 20, 32 << 20, 52 << 20     # unknown: conservative / v7x-safe


# ---------------------------------------------------------------------------
# Wrapper
# ---------------------------------------------------------------------------

def spatial_attention(x_nchw, w1, b1, w2, b2, *,
                      step_target_bytes=None,
                      vmem_tile_budget_bytes=None,
                      max_batch_block=64):
    """x_nchw: (B, C, H, W).
       w1: (C, Ch), b1: (Ch,), w2: (Ch, 1), b2: (1,)  with Ch = C // 8.
       Returns (attended (B,C,H,W), attention (B,1,H,W))."""
    B, C, H, W = x_nchw.shape
    Ch = w1.shape[1]
    HW = H * W
    dtype_bytes = jnp.dtype(x_nchw.dtype).itemsize

    dflt_step, dflt_budget, vmem_cap = _chip_defaults()
    step_target = dflt_step if step_target_bytes is None else step_target_bytes
    tile_budget = dflt_budget if vmem_tile_budget_bytes is None else vmem_tile_budget_bytes

    # Layout glue: reshapes + tiny weight transposes only (no big transposes).
    x_flat = x_nchw.reshape(B, C, HW)
    w1t = jnp.transpose(w1)              # (Ch, C)
    b1_col = b1.reshape(Ch, 1)
    w2_col = w2.reshape(Ch, 1)

    # Per-lane (per spatial position, per batch element inside a block) costs.
    per_lane_vmem = (4 * C * dtype_bytes        # 2 bufs x (x tile + out tile)
                     + 2 * dtype_bytes          # 2 bufs x att tile
                     + 4 * Ch + 8)              # f32 hidden + logits/att temps
    traffic_per_lane = (2 * C + 1) * dtype_bytes

    elem_vmem = HW * per_lane_vmem
    elem_traffic = HW * traffic_per_lane

    B_blk = 1
    tile_hw = HW
    HW_pad = HW

    if elem_vmem <= tile_budget and elem_traffic <= step_target:
        # Small feature maps: amortize per-grid-step overhead across the batch.
        b_cap = min(B, max_batch_block,
                    max(1, step_target // max(1, elem_traffic)),
                    max(1, tile_budget // max(1, elem_vmem)))
        B_blk = _largest_divisor_leq(B, b_cap)
        # Keep >=2 grid steps when the batch allows it (v7x: 2 TensorCores).
        if B_blk == B and B >= 2:
            B_blk = _largest_divisor_leq(B, B // 2)
    elif elem_vmem <= tile_budget:
        # Whole spatial extent per step already exceeds the traffic target.
        tile_hw = HW
    else:
        # Large images: split H*W with a 128-aligned divisor near the traffic
        # target -> copy-free (no pad / output slice).
        lane_target = _round_up(max(128, _ceil_div(step_target, traffic_per_lane)), 128)
        lane_vmem_cap = max(128, (tile_budget // per_lane_vmem) // 128 * 128)
        lane_cap = min(lane_vmem_cap, max(128, 2 * lane_target))
        tile_hw = _largest_aligned_divisor(HW, lane_cap)
        if tile_hw == 0:
            # Last resort (HW has no 128-aligned divisor): padded spatial tail.
            tile_hw = min(lane_cap, lane_target)
            HW_pad = _ceil_div(HW, tile_hw) * tile_hw
            x_flat = jnp.pad(x_flat, ((0, 0), (0, 0), (0, HW_pad - HW)))

    grid = (B // B_blk, HW_pad // tile_hw)

    # VMEM accounting for the compiler limit: double-buffered x/out/att tiles,
    # weights, f32 hidden + temps; capped below physical per-TC VMEM (v7x).
    io_tile = B_blk * tile_hw * (2 * C + 1) * dtype_bytes
    scratch = B_blk * tile_hw * (4 * Ch + 8)
    weights = 4 * (Ch * C + 2 * Ch) + (4 * B_blk * Ch * C if B_blk > 1 else 0)
    working = 2 * io_tile + scratch + weights
    vmem_limit = int(min(vmem_cap, max(32 << 20, int(1.25 * working) + (2 << 20))))

    if B_blk == 1:
        kernel = _sa_kernel_2d
        x_spec = pl.BlockSpec((None, C, tile_hw), lambda b, t: (b, 0, t))
        out_spec = pl.BlockSpec((None, C, tile_hw), lambda b, t: (b, 0, t))
        att_spec = pl.BlockSpec((None, 1, tile_hw), lambda b, t: (b, 0, t))
    else:
        kernel = _sa_kernel_3d
        x_spec = pl.BlockSpec((B_blk, C, tile_hw), lambda b, t: (b, 0, t))
        out_spec = pl.BlockSpec((B_blk, C, tile_hw), lambda b, t: (b, 0, t))
        att_spec = pl.BlockSpec((B_blk, 1, tile_hw), lambda b, t: (b, 0, t))

    out_flat, att_flat = pl.pallas_call(
        kernel,
        out_shape=(
            jax.ShapeDtypeStruct((B, C, HW_pad), x_nchw.dtype),
            jax.ShapeDtypeStruct((B, 1, HW_pad), x_nchw.dtype),
        ),
        grid_spec=pltpu.PrefetchScalarGridSpec(
            num_scalar_prefetch=0,
            grid=grid,
            in_specs=[
                x_spec,                                                   # x tile
                pl.BlockSpec((Ch, C), lambda b, t: (0, 0)),               # W1^T
                pl.BlockSpec((Ch, 1), lambda b, t: (0, 0)),               # b1
                pl.BlockSpec((Ch, 1), lambda b, t: (0, 0)),               # w2
                pl.BlockSpec(memory_space=pltpu.MemorySpace.SMEM),        # b2 scalar
            ],
            out_specs=[out_spec, att_spec],
        ),
        compiler_params=pltpu.CompilerParams(
            dimension_semantics=("parallel", "parallel"),
            vmem_limit_bytes=vmem_limit,
        ),
    )(x_flat, w1t, b1_col, w2_col, b2)

    if HW_pad != HW:
        out_flat = out_flat[:, :, :HW]
        att_flat = att_flat[:, :, :HW]
    attended = out_flat.reshape(B, C, H, W)
    attention = att_flat.reshape(B, 1, H, W)
    return attended, attention


# ---------------------------------------------------------------------------
# Reference + test harness
# ---------------------------------------------------------------------------

def _reference(x_nchw, w1, b1, w2, b2):
    """Pure-JAX reference of the PyTorch forward."""
    B, C, H, W = x_nchw.shape
    x2d = jnp.transpose(x_nchw, (0, 2, 3, 1)).reshape(-1, C)
    h = jnp.maximum(x2d @ w1 + b1[None, :], 0.0)
    att = jax.nn.sigmoid(h @ w2 + b2[None, :])
    att = jnp.transpose(att.reshape(B, H, W, 1), (0, 3, 1, 2))
    return x_nchw * att, att


def _make_params(key, C):
    Ch = C // 8
    kw1, kb1, kw2, kb2 = jax.random.split(key, 4)
    w1 = jax.random.normal(kw1, (C, Ch), dtype=jnp.float32) * (1.0 / jnp.sqrt(C))
    b1 = jax.random.normal(kb1, (Ch,), dtype=jnp.float32) * 0.1
    w2 = jax.random.normal(kw2, (Ch, 1), dtype=jnp.float32) * (1.0 / jnp.sqrt(Ch))
    b2 = jax.random.normal(kb2, (1,), dtype=jnp.float32) * 0.1
    return w1, b1, w2, b2


def _check(x, w1, b1, w2, b2, **kw):
    attended, attention = spatial_attention(x, w1, b1, w2, b2, **kw)
    jax.block_until_ready((attended, attention))
    ra, rt = _reference(x, w1, b1, w2, b2)
    B, C, H, W = x.shape
    assert attended.shape == (B, C, H, W)
    assert attention.shape == (B, 1, H, W)
    assert jnp.allclose(attended, ra, atol=1e-5, rtol=1e-5)
    assert jnp.allclose(attention, rt, atol=1e-5, rtol=1e-5)


if __name__ == "__main__":
    key = jax.random.PRNGKey(0)
    ks = jax.random.split(key, 8)

    # Case 1: tiny shape, single full-extent lane tile per batch element (2-D path).
    x1 = jax.random.normal(ks[0], (2, 16, 8, 8), dtype=jnp.float32)
    p1 = _make_params(ks[1], 16)
    _check(x1, *p1)

    # Case 2: small feature map with batch blocking (3-D batched-einsum path,
    # B_blk=2 -> grid keeps 2 parallel steps).
    x2 = jax.random.normal(ks[2], (4, 16, 16, 16), dtype=jnp.float32)
    p2 = _make_params(ks[3], 16)
    _check(x2, *p2)

    # Case 3: copy-free spatial tiling — tile_hw is a 128-aligned divisor of HW
    # (forced by tiny per-step/VMEM targets), no pad / output slice.
    x3 = jax.random.normal(ks[4], (2, 32, 16, 16), dtype=jnp.float32)
    p3 = _make_params(ks[5], 32)
    _check(x3, *p3, step_target_bytes=32 * 1024, vmem_tile_budget_bytes=64 * 1024)

    # Case 4: last-resort padded-tail path (HW=144 has no 128-aligned divisor).
    x4 = jax.random.normal(ks[6], (1, 32, 12, 12), dtype=jnp.float32)
    p4 = _make_params(ks[7], 32)
    _check(x4, *p4, step_target_bytes=32 * 1024, vmem_tile_budget_bytes=64 * 1024)

    print("KERNEL_OK")
</pallas_src>

<mosaic_0001>
module attributes {stable_mosaic.version = 11 : i64} {
  func.func @_sa_kernel_2d(%arg0: i32, %arg1: i32, %arg2: memref<1x16x64xf32, #tpu.memory_space<vmem>>, %arg3: memref<2x16xf32, #tpu.memory_space<vmem>>, %arg4: memref<2x1xf32, #tpu.memory_space<vmem>>, %arg5: memref<2x1xf32, #tpu.memory_space<vmem>>, %arg6: memref<1xf32, #tpu.memory_space<smem>>, %arg7: memref<1x16x64xf32, #tpu.memory_space<vmem>>, %arg8: memref<1x1x64xf32, #tpu.memory_space<vmem>>) attributes {dimension_semantics = [#tpu.dimension_semantics<parallel>, #tpu.dimension_semantics<parallel>], iteration_bounds = array<i64: 2, 1>, scalar_prefetch = 0 : i64, scratch_operands = 0 : i64, tpu.core_type = #tpu.core_type<tc>, window_params = [{transform_indices = @transform_0, window_bounds = array<i64: 1, 16, 64>}, {pipeline_mode = #tpu.pipeline_mode<synchronous>, transform_indices = @transform_1, window_bounds = array<i64: 2, 16>}, {pipeline_mode = #tpu.pipeline_mode<synchronous>, transform_indices = @transform_2, window_bounds = array<i64: 2, 1>}, {pipeline_mode = #tpu.pipeline_mode<synchronous>, transform_indices = @transform_3, window_bounds = array<i64: 2, 1>}, {transform_indices = @transform_4, window_bounds = array<i64: 1>}, {transform_indices = @transform_5, window_bounds = array<i64: 1, 16, 64>}, {transform_indices = @transform_6, window_bounds = array<i64: 1, 1, 64>}]} {
    %c0 = arith.constant 0 : index
    %c0_0 = arith.constant 0 : index
    %c0_1 = arith.constant 0 : index
    %0 = vector.load %arg2[%c0, %c0_0, %c0_1] : memref<1x16x64xf32, #tpu.memory_space<vmem>>, vector<1x16x64xf32>
    %1 = vector.shape_cast %0 : vector<1x16x64xf32> to vector<16x64xf32>
    %c0_2 = arith.constant 0 : index
    %c0_3 = arith.constant 0 : index
    %2 = vector.load %arg3[%c0_2, %c0_3] : memref<2x16xf32, #tpu.memory_space<vmem>>, vector<2x16xf32>
    %cst = arith.constant dense<0.000000e+00> : vector<2x64xf32>
    %3 = tpu.matmul %2, %1, %cst {dimension_numbers = #tpu.dot_dimension_numbers<[1], [0], [0], [1], [0, 0, 1, 1], [], []>} : vector<2x16xf32>, vector<16x64xf32>, vector<2x64xf32> -> vector<2x64xf32>
    %c0_4 = arith.constant 0 : index
    %c0_5 = arith.constant 0 : index
    %4 = vector.load %arg4[%c0_4, %c0_5] : memref<2x1xf32, #tpu.memory_space<vmem>>, vector<2x1xf32>
    %5 = vector.broadcast %4 : vector<2x1xf32> to vector<2x64xf32>
    %6 = arith.addf %3, %5 : vector<2x64xf32>
    %cst_6 = arith.constant 0.000000e+00 : f32
    %7 = vector.broadcast %cst_6 : f32 to vector<2x64xf32>
    %8 = arith.maximumf %6, %7 : vector<2x64xf32>
    %c0_7 = arith.constant 0 : index
    %c0_8 = arith.constant 0 : index
    %9 = vector.load %arg5[%c0_7, %c0_8] : memref<2x1xf32, #tpu.memory_space<vmem>>, vector<2x1xf32>
    %10 = vector.broadcast %9 : vector<2x1xf32> to vector<2x64xf32>
    %11 = arith.mulf %8, %10 : vector<2x64xf32>
    %cst_9 = arith.constant dense<0.000000e+00> : vector<64xf32>
    %12 = vector.multi_reduction <add>, %11, %cst_9 [0] : vector<2x64xf32> to vector<64xf32>
    %13 = vector.shape_cast %12 : vector<64xf32> to vector<1x64xf32>
    %c0_10 = arith.constant 0 : index
    %14 = memref.load %arg6[%c0_10] : memref<1xf32, #tpu.memory_space<smem>>
    %15 = vector.broadcast %14 : f32 to vector<1x64xf32>
    %16 = arith.addf %13, %15 : vector<1x64xf32>
    %17 = arith.negf %16 : vector<1x64xf32>
    %18 = math.exp %17 : vector<1x64xf32>
    %cst_11 = arith.constant 1.000000e+00 : f32
    %19 = vector.broadcast %cst_11 : f32 to vector<1x64xf32>
    %20 = arith.addf %19, %18 : vector<1x64xf32>
    %21 = arith.divf %19, %20 : vector<1x64xf32>
    %c0_12 = arith.constant 0 : index
    %c0_13 = arith.constant 0 : index
    %c0_14 = arith.constant 0 : index
    %22 = vector.load %arg8[%c0_12, %c0_13, %c0_14] : memref<1x1x64xf32, #tpu.memory_space<vmem>>, vector<1x1x64xf32>
    %23 = vector.shape_cast %22 : vector<1x1x64xf32> to vector<1x64xf32>
    %24 = vector.shape_cast %21 : vector<1x64xf32> to vector<1x1x64xf32>
    tpu.vector_store %arg8[%c0_12, %c0_13, %c0_14], %24 {strides = array<i32>} : memref<1x1x64xf32, #tpu.memory_space<vmem>>, vector<1x1x64xf32>,
    %25 = vector.broadcast %21 : vector<1x64xf32> to vector<16x64xf32>
    %26 = arith.mulf %1, %25 : vector<16x64xf32>
    %c0_15 = arith.constant 0 : index
    %c0_16 = arith.constant 0 : index
    %c0_17 = arith.constant 0 : index
    %27 = vector.load %arg7[%c0_15, %c0_16, %c0_17] : memref<1x16x64xf32, #tpu.memory_space<vmem>>, vector<1x16x64xf32>
    %28 = vector.shape_cast %27 : vector<1x16x64xf32> to vector<16x64xf32>
    %29 = vector.shape_cast %26 : vector<16x64xf32> to vector<1x16x64xf32>
    tpu.vector_store %arg7[%c0_15, %c0_16, %c0_17], %29 {strides = array<i32>} : memref<1x16x64xf32, #tpu.memory_space<vmem>>, vector<1x16x64xf32>,
    return
  }
  func.func @transform_0(%arg0: i32, %arg1: i32) -> (i32, i32, i32) {
    %c0_i32 = arith.constant 0 : i32
    %c0_i32_0 = arith.constant 0 : i32
    return %arg0, %c0_i32, %arg1 : i32, i32, i32
  }
  func.func @transform_1(%arg0: i32, %arg1: i32) -> (i32, i32) {
    %c0_i32 = arith.constant 0 : i32
    %c0_i32_0 = arith.constant 0 : i32
    %c0_i32_1 = arith.constant 0 : i32
    return %c0_i32, %c0_i32_0 : i32, i32
  }
  func.func @transform_2(%arg0: i32, %arg1: i32) -> (i32, i32) {
    %c0_i32 = arith.constant 0 : i32
    %c0_i32_0 = arith.constant 0 : i32
    %c0_i32_1 = arith.constant 0 : i32
    return %c0_i32, %c0_i32_0 : i32, i32
  }
  func.func @transform_3(%arg0: i32, %arg1: i32) -> (i32, i32) {
    %c0_i32 = arith.constant 0 : i32
    %c0_i32_0 = arith.constant 0 : i32
    %c0_i32_1 = arith.constant 0 : i32
    return %c0_i32, %c0_i32_0 : i32, i32
  }
  func.func @transform_4(%arg0: i32, %arg1: i32) -> i32 {
    %c0_i32 = arith.constant 0 : i32
    %c0_i32_0 = arith.constant 0 : i32
    return %c0_i32 : i32
  }
  func.func @transform_5(%arg0: i32, %arg1: i32) -> (i32, i32, i32) {
    %c0_i32 = arith.constant 0 : i32
    %c0_i32_0 = arith.constant 0 : i32
    return %arg0, %c0_i32, %arg1 : i32, i32, i32
  }
  func.func @transform_6(%arg0: i32, %arg1: i32) -> (i32, i32, i32) {
    %c0_i32 = arith.constant 0 : i32
    %c0_i32_0 = arith.constant 0 : i32
    return %arg0, %c0_i32, %arg1 : i32, i32, i32
  }
}

</mosaic_0001>

<llo_original>
// kernel: tpu_custom_call.1
$region0: #{tpu_custom_call.1}
  #allocation0 [shape = 'u32[]', space=smem, size = 0x4, offset = 0x4, fixed_abs, tag = 'smem constant byte address 0x4 - core index']
  #allocation1 [shape = 'u32[144,128]{1,0:T(1,128)}', space=vmem, size = 0x12000, scoped, tag = 'internal scratch']
  #allocation2 [shape = 'f32[1]{0:T(128)S(6)}', space=smem, size = 0x200, scoped, tag = 'scoped memory for tpu_custom_call.1']
  %s0 = inlined_call_operand.hbm [shape: f32[2,16,64], index: 0, kind: input, shape index: {}]
  %s1 = inlined_call_operand.vmem [shape: f32[2,16], index: 1, kind: input, shape index: {}]
  %s2 = inlined_call_operand.vmem [shape: f32[2,1], index: 2, kind: input, shape index: {}]
  %s3 = inlined_call_operand.vmem [shape: f32[2,1], index: 3, kind: input, shape index: {}]
  %s4 = inlined_call_operand.<no memory space> [shape: f32[1], index: 4, kind: input, shape index: {}]
  %s5 = inlined_call_operand.hbm [shape: f32[2,16,64], index: 5, kind: output, shape index: {0}]
  %s6 = inlined_call_operand.hbm [shape: f32[2,1,64], index: 6, kind: output, shape index: {1}]
  %7 = xla_tuple %s5, %s6
  %s8 = sld [smem:[#allocation0]]
  $region65: #{tpu_custom_call.1} parent=0
    _
  %s10 = ssub.s32 1, %s8
  %s11 = scalar_select 0, %s10, %s8
  %12 = sst [smem:[#allocation2]] %s4
  $region1: #{tpu_custom_call.1} parent=0
    #allocation3 [shape = 'u8[16384]{0}', space=vmem, size = 0x4000, scoped, tag = 'input window, operand 0']
    #allocation4 [shape = 's32[2]{0}', space=sflag, size = 0x8, scoped, tag = 'scoped memory for tpu_custom_call.1']
    #allocation5 [shape = 's32[2]{0}', space=sflag, size = 0x8, scoped, tag = 'scoped memory for tpu_custom_call.1']
    #allocation6 [shape = 'u8[16384]{0}', space=vmem, size = 0x4000, scoped, tag = 'output window, operand 0']
    #allocation7 [shape = 'u8[1024]{0}', space=vmem, size = 0x400, scoped, tag = 'output window, operand 1']
    #allocation8 [shape = 's32[2]{0}', space=sflag, size = 0x8, scoped, tag = 'scoped memory for tpu_custom_call.1']
    %13 = vsyncpa [#allocation4], 0
    %s14 = scalar_lea.sflag [#allocation4], 1
    %15 = vsyncpa %s14, 0
    %16 = vsyncpa [#allocation5], 0
    %s17 = scalar_lea.sflag [#allocation5], 1
    %18 = vsyncpa %s17, 0
    %19 = vsyncpa [#allocation8], 0
    %s20 = scalar_lea.sflag [#allocation8], 1
    %21 = vsyncpa %s20, 0
    loop: start=0, step=1, limit=4
    $region2: #{tpu_custom_call.1} parent=1 // loop_pre_header
      _
    $region3: #{tpu_custom_call.1} parent=1 // loop_header
      %s23 = sphi 0, %s27
      %p24 = scmp.ge.s32.totalorder %s23, 4
      %s30 = sphi 0, %s42
      %s31 = sphi 0, %s38
      %s32 = sphi 0, %s30
      %s33 = sphi 0, %s31
      %s34 = sphi 0, %s32
      %s35 = sphi 0, %s33
      %s47 = sphi 0, %s49
      %s50 = sphi 0, %s47
      %s51 = sphi 0, %s50
      %s67 = sphi 0, %s51
      %s71 = sphi 0, %s71
      %s73 = sphi 0, %s71
      %s74 = sphi 0, %s73
      %s88 = sphi 0, %s74
      %s92 = sphi 0, %s92
      %s94 = sphi 0, %s92
      %s95 = sphi 0, %s94
      %s109 = sphi 0, %s95
      %s113 = sphi 0, %s113
      %s115 = sphi 0, %s113
      %s116 = sphi 0, %s115
      %s130 = sphi 0, %s116
      %s134 = sphi 0, %s134
      %s136 = sphi 0, %s134
      %s137 = sphi 0, %s136
      %s151 = sphi 0, %s137
      %s159 = sphi 0, %s161
      %s162 = sphi 0, %s159
      %s163 = sphi 0, %s162
      %s179 = sphi 0, %s163
      %s187 = sphi 0, %s189
      %s190 = sphi 0, %s187
      %s191 = sphi 0, %s190
      %s207 = sphi 0, %s191
    $region4: #{tpu_custom_call.1} parent=1 // loop_header_branch
      %26 = sbr.rel (%p24) target = $region8
    $region5: #{tpu_custom_call.1} parent=1 // loop_body
      %s28 = ssub.s32 %s23, 1
      %s29 = ssub.s32 %s23, 2
      %s36 = sadd.s32 1, %s31
      %p37 = scmp.ge.s32.totalorder %s36, 1
      %s38 = scalar_select %p37, 0, %s36
      %s39 = sadd.s32 1, %s30
      %s40 = scalar_select %p37, %s39, %s30
      %p41 = scmp.ge.s32.totalorder %s40, 2
      %s42 = scalar_select %p41, 0, %s40
      %s43 = ssub.s32 %s30, %s42
      %s44 = ssub.s32 %s31, %s38
      %s45 = sor.u32 %s43, %s44
      %p46 = scmp.eq.s32.totalorder %s45, 0
      %s48 = sadd.s32 %s47, 1
      %s49 = scalar_select %p46, %s47, %s48
      %p52 = pneg %p46
      %p53 = scmp.eq.s32.totalorder %s23, 1
      %p54 = por %p52, %p53
      %p55 = scmp.ne.s32.totalorder %s47, %s50
      %p56 = scmp.eq.s32.totalorder %s23, 0
      %p57 = por %p55, %p56
      %p58 = scmp.ne.s32.totalorder %s47, %s50
      %p59 = scmp.eq.s32.totalorder %s28, 1
      %p60 = por %p58, %p59
      %p61 = scmp.ne.s32.totalorder %s50, %s51
      %p62 = scmp.eq.s32.totalorder %s28, 0
      %p63 = por %p61, %p62
      %p64 = scmp.ne.s32.totalorder %s50, %s51
      %p65 = scmp.eq.s32.totalorder %s29, 1
      %p66 = por %p64, %p65
      %p68 = scmp.ne.s32.totalorder %s51, %s67
      %p69 = scmp.eq.s32.totalorder %s29, 0
      %p70 = por %p68, %p69
      %s72 = sadd.s32 %s71, 1
      %p75 = scmp.eq.s32.totalorder %s23, 1
      %p76 = scmp.ne.s32.totalorder %s71, %s73
      %p77 = scmp.eq.s32.totalorder %s23, 0
      %p78 = por %p76, %p77
      %p79 = scmp.ne.s32.totalorder %s71, %s73
      %p80 = scmp.eq.s32.totalorder %s28, 1
      %p81 = por %p79, %p80
      %p82 = scmp.ne.s32.totalorder %s73, %s74
      %p83 = scmp.eq.s32.totalorder %s28, 0
      %p84 = por %p82, %p83
      %p85 = scmp.ne.s32.totalorder %s73, %s74
      %p86 = scmp.eq.s32.totalorder %s29, 1
      %p87 = por %p85, %p86
      %p89 = scmp.ne.s32.totalorder %s74, %s88
      %p90 = scmp.eq.s32.totalorder %s29, 0
      %p91 = por %p89, %p90
      %s93 = sadd.s32 %s92, 1
      %p96 = scmp.eq.s32.totalorder %s23, 1
      %p97 = scmp.ne.s32.totalorder %s92, %s94
      %p98 = scmp.eq.s32.totalorder %s23, 0
      %p99 = por %p97, %p98
      %p100 = scmp.ne.s32.totalorder %s92, %s94
      %p101 = scmp.eq.s32.totalorder %s28, 1
      %p102 = por %p100, %p101
      %p103 = scmp.ne.s32.totalorder %s94, %s95
      %p104 = scmp.eq.s32.totalorder %s28, 0
      %p105 = por %p103, %p104
      %p106 = scmp.ne.s32.totalorder %s94, %s95
      %p107 = scmp.eq.s32.totalorder %s29, 1
      %p108 = por %p106, %p107
      %p110 = scmp.ne.s32.totalorder %s95, %s109
      %p111 = scmp.eq.s32.totalorder %s29, 0
      %p112 = por %p110, %p111
      %s114 = sadd.s32 %s113, 1
      %p117 = scmp.eq.s32.totalorder %s23, 1
      %p118 = scmp.ne.s32.totalorder %s113, %s115
      %p119 = scmp.eq.s32.totalorder %s23, 0
      %p120 = por %p118, %p119
      %p121 = scmp.ne.s32.totalorder %s113, %s115
      %p122 = scmp.eq.s32.totalorder %s28, 1
      %p123 = por %p121, %p122
      %p124 = scmp.ne.s32.totalorder %s115, %s116
      %p125 = scmp.eq.s32.totalorder %s28, 0
      %p126 = por %p124, %p125
      %p127 = scmp.ne.s32.totalorder %s115, %s116
      %p128 = scmp.eq.s32.totalorder %s29, 1
      %p129 = por %p127, %p128
      %p131 = scmp.ne.s32.totalorder %s116, %s130
      %p132 = scmp.eq.s32.totalorder %s29, 0
      %p133 = por %p131, %p132
      %s135 = sadd.s32 %s134, 1
      %p138 = scmp.eq.s32.totalorder %s23, 1
      %p139 = scmp.ne.s32.totalorder %s134, %s136
      %p140 = scmp.eq.s32.totalorder %s23, 0
      %p141 = por %p139, %p140
      %p142 = scmp.ne.s32.totalorder %s134, %s136
      %p143 = scmp.eq.s32.totalorder %s28, 1
      %p144 = por %p142, %p143
      %p145 = scmp.ne.s32.totalorder %s136, %s137
      %p146 = scmp.eq.s32.totalorder %s28, 0
      %p147 = por %p145, %p146
      %p148 = scmp.ne.s32.totalorder %s136, %s137
      %p149 = scmp.eq.s32.totalorder %s29, 1
      %p150 = por %p148, %p149
      %p152 = scmp.ne.s32.totalorder %s137, %s151
      %p153 = scmp.eq.s32.totalorder %s29, 0
      %p154 = por %p152, %p153
      %s155 = ssub.s32 %s30, %s42
      %s156 = ssub.s32 %s31, %s38
      %s157 = sor.u32 %s155, %s156
      %p158 = scmp.eq.s32.totalorder %s157, 0
      %s160 = sadd.s32 %s159, 1
      %s161 = scalar_select %p158, %s159, %s160
      %p164 = pneg %p158
      %p165 = scmp.eq.s32.totalorder %s23, 1
      %p166 = por %p164, %p165
      %p167 = scmp.ne.s32.totalorder %s159, %s162
      %p168 = scmp.eq.s32.totalorder %s23, 0
      %p169 = por %p167, %p168
      %p170 = scmp.ne.s32.totalorder %s159, %s162
      %p171 = scmp.eq.s32.totalorder %s28, 1
      %p172 = por %p170, %p171
      %p173 = scmp.ne.s32.totalorder %s162, %s163
      %p174 = scmp.eq.s32.totalorder %s28, 0
      %p175 = por %p173, %p174
      %p176 = scmp.ne.s32.totalorder %s162, %s163
      %p177 = scmp.eq.s32.totalorder %s29, 1
      %p178 = por %p176, %p177
      %p180 = scmp.ne.s32.totalorder %s163, %s179
      %p181 = scmp.eq.s32.totalorder %s29, 0
      %p182 = por %p180, %p181
      %s183 = ssub.s32 %s30, %s42
      %s184 = ssub.s32 %s31, %s38
      %s185 = sor.u32 %s183, %s184
      %p186 = scmp.eq.s32.totalorder %s185, 0
      %s188 = sadd.s32 %s187, 1
      %s189 = scalar_select %p186, %s187, %s188
      %p192 = pneg %p186
      %p193 = scmp.eq.s32.totalorder %s23, 1
      %p194 = por %p192, %p193
      %p195 = scmp.ne.s32.totalorder %s187, %s190
      %p196 = scmp.eq.s32.totalorder %s23, 0
      %p197 = por %p195, %p196
      %p198 = scmp.ne.s32.totalorder %s187, %s190
      %p199 = scmp.eq.s32.totalorder %s28, 1
      %p200 = por %p198, %p199
      %p201 = scmp.ne.s32.totalorder %s190, %s191
      %p202 = scmp.eq.s32.totalorder %s28, 0
      %p203 = por %p201, %p202
      %p204 = scmp.ne.s32.totalorder %s190, %s191
      %p205 = scmp.eq.s32.totalorder %s29, 1
      %p206 = por %p204, %p205
      %p208 = scmp.ne.s32.totalorder %s191, %s207
      %p209 = scmp.eq.s32.totalorder %s29, 0
      %p210 = por %p208, %p209
      %p211 = scmp.le.s32.totalorder 1, %s23
      %p212 = scmp.lt.s32.totalorder %s23, 3
      %p213 = pnand %p211, %p212
      %p214 = pneg %p213
      // Predicated region
      $region9: #{tpu_custom_call.1} parent=5 // pred_check
        _
      $region10: #{tpu_custom_call.1} parent=5 // pred_check_branch
        %216 = sbr.rel (%p213) target = $region12
      $region11: #{tpu_custom_call.1} parent=5 // pred_region
        %s217 = ssub.s32 %s23, 1
        // Predicated region
        $region13: #{tpu_custom_call.1} parent=11 // pred_check
          %p218 = pneg %p84
        $region14: #{tpu_custom_call.1} parent=11 // pred_check_branch
          %220 = sbr.rel (%p218) target = $region16
        $region15: #{tpu_custom_call.1} parent=11 // pred_region
          _
        $region16: #{tpu_custom_call.1} parent=11 // pred_fallthru
          _
        // Predicated region
        $region17: #{tpu_custom_call.1} parent=11 // pred_check
          %p221 = pneg %p105
        $region18: #{tpu_custom_call.1} parent=11 // pred_check_branch
          %223 = sbr.rel (%p221) target = $region20
        $region19: #{tpu_custom_call.1} parent=11 // pred_region
          _
        $region20: #{tpu_custom_call.1} parent=11 // pred_fallthru
          _
        // Predicated region
        $region21: #{tpu_custom_call.1} parent=11 // pred_check
          %p224 = pneg %p126
        $region22: #{tpu_custom_call.1} parent=11 // pred_check_branch
          %226 = sbr.rel (%p224) target = $region24
        $region23: #{tpu_custom_call.1} parent=11 // pred_region
          _
        $region24: #{tpu_custom_call.1} parent=11 // pred_fallthru
          _
        // Predicated region
        $region25: #{tpu_custom_call.1} parent=11 // pred_check
          %p227 = pneg %p147
        $region26: #{tpu_custom_call.1} parent=11 // pred_check_branch
          %229 = sbr.rel (%p227) target = $region28
        $region27: #{tpu_custom_call.1} parent=11 // pred_region
          _
        $region28: #{tpu_custom_call.1} parent=11 // pred_fallthru
          _
      $region12: #{tpu_custom_call.1} parent=5 // pred_fallthru
        _
      %p230 = scmp.lt.s32.totalorder %s23, 2
      // Predicated region
      $region29: #{tpu_custom_call.1} parent=5 // pred_check
        %p231 = pneg %p230
      $region30: #{tpu_custom_call.1} parent=5 // pred_check_branch
        %233 = sbr.rel (%p231) target = $region32
      $region31: #{tpu_custom_call.1} parent=5 // pred_region
        // Predicated region
        $region33: #{tpu_custom_call.1} parent=31 // pred_check
          %p234 = pneg %p57
        $region34: #{tpu_custom_call.1} parent=31 // pred_check_branch
          %236 = sbr.rel (%p234) target = $region36
        $region35: #{tpu_custom_call.1} parent=31 // pred_region
          %s237 = sand.u32 %s47, 1
          %s238 = scalar_lea.sflag [#allocation4], %s237
          %s239 = sand.u32 %s47, 1
          %s240 = smul.addr %s239, 16
          %s241 = scalar_lea.vmem [#allocation3], %s240
          %s243 = ssub.s32 256, 256
          %244 = vsyncadd %s238, %s243
          %s245 = smul.addr %s30, 2
          %s246 = sadd.s32 %s31, %s245
          %s247 = smul.addr %s246, 128
          %s248 = scalar_lea.hbm %s0, %s247
          %s249 = sshll.u32 %s241, 4
          %s250 = int_to_ptr.vmem [resolvable:$true] %s249
          %255 = dma.hbm_to_vmem [thread:$0]  %s248, 256, %s250, %s238, 128, 128, 8
        $region36: #{tpu_custom_call.1} parent=31 // pred_fallthru
          _
      $region32: #{tpu_custom_call.1} parent=5 // pred_fallthru
        _
      %p256 = scmp.le.s32.totalorder 1, %s23
      %p257 = scmp.lt.s32.totalorder %s23, 3
      %p258 = pnand %p256, %p257
      %p259 = pneg %p258
      // Predicated region
      $region37: #{tpu_custom_call.1} parent=5 // pred_check
        _
      $region38: #{tpu_custom_call.1} parent=5 // pred_check_branch
        %261 = sbr.rel (%p258) target = $region40
      $region39: #{tpu_custom_call.1} parent=5 // pred_region
        %s262 = ssub.s32 %s23, 1
        %s263 = sand.u32 %s50, 1
        %s264 = scalar_lea.sflag [#allocation4], %s263
        %s265 = sand.u32 %s50, 1
        %s266 = smul.addr %s265, 16
        %s267 = scalar_lea.vmem [#allocation3], %s266
        // Predicated region
        $region41: #{tpu_custom_call.1} parent=39 // pred_check
          %p268 = pneg %p63
        $region42: #{tpu_custom_call.1} parent=39 // pred_check_branch
          %270 = sbr.rel (%p268) target = $region44
        $region43: #{tpu_custom_call.1} parent=39 // pred_region
          %271 = dma.done %s264, 256
        $region44: #{tpu_custom_call.1} parent=39 // pred_fallthru
          _
        %s272 = sand.u32 %s50, 1
        %s273 = scalar_lea.sflag [#allocation4], %s272
        %s274 = sand.u32 %s50, 1
        %s275 = smul.addr %s274, 16
        %s276 = scalar_lea.vmem [#allocation3], %s275
        %p277 = pneg %p63
        %p278 = pneg %p60
        %p279 = pneg %p84
        %p280 = pneg %p81
        %p281 = pneg %p105
        %p282 = pneg %p102
        %p283 = pneg %p126
        %p284 = pneg %p123
        %p285 = pneg %p147
        %p286 = pneg %p144
        %p287 = pneg %p175
        %p288 = pneg %p172
        %s289 = sand.u32 %s162, 1
        %s290 = scalar_lea.sflag [#allocation5], %s289
        %s291 = sand.u32 %s162, 1
        %s292 = smul.addr %s291, 16
        %s293 = scalar_lea.vmem [#allocation6], %s292
        %p294 = pneg %p203
        %p295 = pneg %p200
        %s296 = sand.u32 %s190, 1
        %s297 = scalar_lea.sflag [#allocation8], %s296
        %s298 = sand.u32 %s190, 1
        %s299 = scalar_lea.vmem [#allocation7], %s298
        %v300 = vld [vmem:[%s267] sm:$0xff]
        %v301 = vld [vmem:[%s267 + $0x8] sm:$0xff]
        %v302 = vld [vmem:[%s1] sm:$0x3]
        %v303 = vld [vmem:[%s2] sm:$0x3]
        %305 = vset.pattern.permute.xlu0 0
        %306 = vperm.xlu0 %305, %v303
        %v307 = vpop.permute.xlu0 %306
        %vm309 = vcmask 130048
        %v311 = vsel %vm309, %v302, 0
        %313 = vmatprep.subr.mxu0 0.0
        %314 = vmatpush1.msra.mxu0 %v300
        %315 = vmatprep.subr.mxu0 0.0
        %316 = vmatpush1.msra.mxu0 %v301
        %317 = vmatprep.subr.mxu0 0.0
        %318 = vmatpush1.msra.mxu0 0.0
        %319 = vmatprep.subr.mxu0 0.0
        %320 = vmatpush1.msra.mxu0 0.0
        %321 = vmatprep.subr.mxu0 0.0
        %322 = vmatpush1.msra.mxu0 0.0
        %323 = vmatprep.subr.mxu0 0.0
        %324 = vmatpush1.msra.mxu0 0.0
        %325 = vmatprep.subr.mxu0 0.0
        %326 = vmatpush1.msra.mxu0 0.0
        %327 = vmatprep.subr.mxu0 0.0
        %328 = vmatpush1.msra.mxu0 0.0
        %329 = vmatprep.subr.mxu0 0.0
        %330 = vmatpush1.msra.mxu0 0.0
        %331 = vmatprep.subr.mxu0 0.0
        %332 = vmatpush1.msra.mxu0 0.0
        %333 = vmatprep.subr.mxu0 0.0
        %334 = vmatpush1.msra.mxu0 0.0
        %335 = vmatprep.subr.mxu0 0.0
        %336 = vmatpush1.msra.mxu0 0.0
        %337 = vmatprep.subr.mxu0 0.0
        %338 = vmatpush1.msra.mxu0 0.0
        %339 = vmatprep.subr.mxu0 0.0
        %340 = vmatpush1.msra.mxu0 0.0
        %341 = vmatprep.subr.mxu0 0.0
        %342 = vmatpush1.msra.mxu0 0.0
        %343 = vmatprep.subr.mxu0 0.0
        %344 = vmatpush1.msra.mxu0 0.0
        %345 = vmatprep.subr.mxu0 0.0
        %346 = vmatpush1.msra.mxu0 0.0
        %347 = vmatprep.subr.mxu0 0.0
        %348 = vmatpush1.msra.mxu0 0.0
        %349 = vmatprep.subr.mxu0 0.0
        %350 = vmatpush1.msra.mxu0 0.0
        %351 = vmatprep.subr.mxu0 0.0
        %352 = vmatpush1.msra.mxu0 0.0
        %353 = vmatprep.subr.mxu0 0.0
        %354 = vmatpush1.msra.mxu0 0.0
        %355 = vmatprep.subr.mxu0 0.0
        %356 = vmatpush1.msra.mxu0 0.0
        %357 = vmatprep.subr.mxu0 0.0
        %358 = vmatpush1.msra.mxu0 0.0
        %359 = vmatprep.subr.mxu0 0.0
        %360 = vmatpush1.msra.mxu0 0.0
        %361 = vmatprep.subr.mxu0 0.0
        %362 = vmatpush1.msra.mxu0 0.0
        %363 = vmatprep.subr.mxu0 0.0
        %364 = vmatpush1.msra.mxu0 0.0
        %365 = vmatprep.subr.mxu0 0.0
        %366 = vmatpush1.msra.mxu0 0.0
        %367 = vmatprep.subr.mxu0 0.0
        %368 = vmatpush1.msra.mxu0 0.0
        %369 = vmatprep.subr.mxu0 0.0
        %370 = vmatpush1.msra.mxu0 0.0
        %371 = vmatprep.subr.mxu0 0.0
        %372 = vmatpush1.msra.mxu0 0.0
        %373 = vmatprep.subr.mxu0 0.0
        %374 = vmatpush1.msra.mxu0 0.0
        %375 = vmatprep.subr.mxu0 0.0
        %376 = vmatpush1.msra.mxu0 0.0
        %377 = vmatprep.mubr.f32.mxu0 0.0
        %378 = vmatmul.mubr.f32.gmra.mrb[0].mxu0 %v311
        %v379 = vpop.f32.mrb[0].mxu0
        %v380 = vadd.f32 %v307, %v379
        %v381 = vpop.f32.mrb[0].mxu0
        %382 = vdwg.mxu0
        %v383 = vmax.f32 %v380, 0.0
        %v384 = vld [vmem:[%s3] sm:$0x3]
        %386 = vset.pattern.permute.xlu0 0
        %387 = vperm.xlu0 %386, %v384
        %v388 = vpop.permute.xlu0 %387
        %v390 = vmul.f32 %v383, %v388
        %vm391 = vcmask 517120
        %v392 = vsel %vm391, %v390, 0.0
        %v393 = vrot.slane %v392, 4
        %v394 = vadd.f32 %v392, %v393
        %v395 = vrot.slane %v394, 2
        %v396 = vadd.f32 %v394, %v395
        %v397 = vrot.slane %v396, 1
        %v398 = vadd.f32 %v396, %v397
        %s399 = sld [smem:[#allocation2]]
        %v400 = vstv %s399
        %v401 = vadd.f32 %v398, %v400
        %v402 = vxor.u32 %v401, 2147483648
        %v403 = vmul.f32 %v402, 1.442695
        %v404 = vpow.pop %v403
        %v405 = vadd.f32 %v404, 1.0
        %v406 = vrcp.pop %v405
        %v407 = vmul.f32 1.0, %v406
        %vm408 = vcmask 516096
        %409 = vst.msk [vmem:[%s299] sm:$0x1] %vm408, %v407
        %v410 = vmul.f32 %v300, %v407
        %v411 = vmul.f32 %v301, %v407
        %vm412 = vcmask 523264
        %413 = vst.msk [vmem:[%s293] sm:$0xff] %vm412, %v410
        %414 = vst.msk [vmem:[%s293 + $0x8] sm:$0xff] %vm412, %v411
        %s415 = sand.u32 %s162, 1
        %s416 = scalar_lea.sflag [#allocation5], %s415
        %s417 = sand.u32 %s162, 1
        %s418 = smul.addr %s417, 16
        %s419 = scalar_lea.vmem [#allocation6], %s418
        %s420 = sand.u32 %s190, 1
        %s421 = scalar_lea.sflag [#allocation8], %s420
        %s422 = sand.u32 %s190, 1
        %s423 = scalar_lea.vmem [#allocation7], %s422
        // Predicated region
        $region45: #{tpu_custom_call.1} parent=39 // pred_check
          %p424 = pneg %p172
        $region46: #{tpu_custom_call.1} parent=39 // pred_check_branch
          %426 = sbr.rel (%p424) target = $region48
        $region47: #{tpu_custom_call.1} parent=39 // pred_region
          %s428 = ssub.s32 256, 256
          %429 = vsyncadd %s416, %s428
          %s430 = smul.addr %s32, 2
          %s431 = sadd.s32 %s33, %s430
          %s432 = smul.addr %s431, 128
          %s433 = scalar_lea.hbm %s5, %s432
          %s434 = sshll.u32 %s419, 4
          %s435 = int_to_ptr.vmem [resolvable:$true] %s434
          %440 = dma.vmem_to_hbm [thread:$0]  %s435, 256, %s433, %s416, 128, 128, 8
        $region48: #{tpu_custom_call.1} parent=39 // pred_fallthru
          _
        // Predicated region
        $region49: #{tpu_custom_call.1} parent=39 // pred_check
          %p441 = pneg %p200
        $region50: #{tpu_custom_call.1} parent=39 // pred_check_branch
          %443 = sbr.rel (%p441) target = $region52
        $region51: #{tpu_custom_call.1} parent=39 // pred_region
          %s445 = ssub.s32 16, 16
          %446 = vsyncadd %s421, %s445
          %s447 = sadd.s32 %s33, %s32
          %s448 = smul.addr %s447, 16
          %s449 = scalar_lea.hbm %s6, %s448
          %s451 = sshll.u32 %s423, 4
          %s452 = int_to_ptr.vmem [resolvable:$true] %s451
          %454 = dma.vmem_to_hbm [thread:$0]  %s452, 16, %s449, %s421
        $region52: #{tpu_custom_call.1} parent=39 // pred_fallthru
          _
      $region40: #{tpu_custom_call.1} parent=5 // pred_fallthru
        _
      %p455 = scmp.le.s32.totalorder 2, %s23
      // Predicated region
      $region53: #{tpu_custom_call.1} parent=5 // pred_check
        %p456 = pneg %p455
      $region54: #{tpu_custom_call.1} parent=5 // pred_check_branch
        %458 = sbr.rel (%p456) target = $region56
      $region55: #{tpu_custom_call.1} parent=5 // pred_region
        %s459 = ssub.s32 %s23, 2
        // Predicated region
        $region57: #{tpu_custom_call.1} parent=55 // pred_check
          %p460 = pneg %p178
        $region58: #{tpu_custom_call.1} parent=55 // pred_check_branch
          %462 = sbr.rel (%p460) target = $region60
        $region59: #{tpu_custom_call.1} parent=55 // pred_region
          %s463 = sand.u32 %s163, 1
          %s464 = scalar_lea.sflag [#allocation5], %s463
          %s465 = sand.u32 %s163, 1
          %s466 = smul.addr %s465, 16
          %s467 = scalar_lea.vmem [#allocation6], %s466
          %468 = dma.done %s464, 256
        $region60: #{tpu_custom_call.1} parent=55 // pred_fallthru
          _
        // Predicated region
        $region61: #{tpu_custom_call.1} parent=55 // pred_check
          %p469 = pneg %p206
        $region62: #{tpu_custom_call.1} parent=55 // pred_check_branch
          %471 = sbr.rel (%p469) target = $region64
        $region63: #{tpu_custom_call.1} parent=55 // pred_region
          %s472 = sand.u32 %s191, 1
          %s473 = scalar_lea.sflag [#allocation8], %s472
          %s474 = sand.u32 %s191, 1
          %s475 = scalar_lea.vmem [#allocation7], %s474
          %476 = dma.done %s473, 16
        $region64: #{tpu_custom_call.1} parent=55 // pred_fallthru
          _
      $region56: #{tpu_custom_call.1} parent=5 // pred_fallthru
        _
    $region6: #{tpu_custom_call.1} parent=1 // loop_footer
      %s27 = sadd.s32 1, %s23
    $region7: #{tpu_custom_call.1} parent=1 // loop_footer_branch
      %22 = sbr.rel target = $region3
    $region8: #{tpu_custom_call.1} parent=1 // loop_exit
      _
    %477 = vsyncpa [#allocation4], 1
    %s478 = scalar_lea.sflag [#allocation4], 1
    %479 = vsyncpa %s478, 1
    %480 = vsyncpa [#allocation5], 1
    %s481 = scalar_lea.sflag [#allocation5], 1
    %482 = vsyncpa %s481, 1
    %483 = vsyncpa [#allocation8], 1
    %s484 = scalar_lea.sflag [#allocation8], 1
    %485 = vsyncpa %s484, 1

</llo_original>
